<compile_context>
chip_gen: v6e
topology: v6e:2x2x1
jax: 0.10.0
libtpu: 0.0.40
codegen_flags: <defaults>
</compile_context>

<pallas_src>
import functools

import jax
import jax.numpy as jnp
from jax.experimental import pallas as pl
from jax.experimental.pallas import tpu as pltpu


def _proj_kernel(v_ref, w_ref, b_ref, out_ref):
    """out = V @ W_fold + b_fold for one (row_tile, n_tile) output tile."""
    acc = jnp.dot(v_ref[...], w_ref[...], preferred_element_type=jnp.float32)
    out_ref[...] = (acc + b_ref[...]).astype(out_ref.dtype)


def _vmem_cap_bytes():
    """Physical VMEM minus ~12 MiB headroom (generation-aware; 64 MiB fallback)."""
    phys = 64 << 20
    try:
        phys = int(getattr(pltpu.get_tpu_info(), "vmem_capacity_bytes", phys))
    except Exception:
        pass
    return max(32 << 20, phys - (12 << 20))


def _probe_single_buffer():
    """Check once whether pipeline_mode=pl.Buffered(1) lowers on this build."""
    try:
        def k(x_ref, o_ref):
            o_ref[...] = x_ref[...]

        call = pl.pallas_call(
            k,
            out_shape=jax.ShapeDtypeStruct((16, 128), jnp.float32),
            grid_spec=pltpu.PrefetchScalarGridSpec(
                num_scalar_prefetch=0,
                grid=(2,),
                in_specs=[pl.BlockSpec((8, 128), lambda i: (0, 0),
                                       pipeline_mode=pl.Buffered(1))],
                out_specs=pl.BlockSpec((8, 128), lambda i: (i, 0)),
            ),
        )
        jax.jit(call).lower(jax.ShapeDtypeStruct((16, 128), jnp.float32)).compile()
        return True
    except Exception:
        return False


_VMEM_CAP = _vmem_cap_bytes()
_SINGLE_BUFFER_OK = _probe_single_buffer()


def _pick_tiles(M, E, row_tile, v_isize, w_isize, o_isize):
    """Pick (row_tile, col_tile, vmem_limit) for the grid (all static ints)."""
    # Row tile: multiple of 8 (or == M). For small M, shrink so there are >=2
    # grid steps — keeps v7x's second TensorCore busy; harmless on v5e/v6e.
    if M <= 8:
        rt = M
    elif M <= row_tile:
        rt = 8 * pl.cdiv(pl.cdiv(M, 2), 8)
    else:
        rt = row_tile

    def need(nt, wbuf):
        return int(1.5 * (wbuf * E * nt * w_isize      # resident folded weight
                          + wbuf * nt * 4              # folded bias (f32)
                          + 2 * rt * E * v_isize       # double-buffered V tile
                          + 2 * rt * nt * o_isize))    # double-buffered out tile

    # Column tile: full E when the resident weight fits VMEM (always true for
    # small E, e.g. the demo E=32); otherwise tile columns in multiples of 128.
    if E < 256 or need(E, 1) <= _VMEM_CAP:
        nt = E
    else:
        nt = max(128, 128 * ((E // 2) // 128))
        while nt > 128 and need(nt, 2) > _VMEM_CAP:
            nt = max(128, 128 * ((nt // 2) // 128))

    wbuf = 1 if (nt == E and _SINGLE_BUFFER_OK) else 2
    vmem_limit = max(32 << 20, min(need(nt, wbuf), _VMEM_CAP))
    return rt, nt, vmem_limit


@functools.partial(jax.jit, static_argnames=("row_tile",))
def multi_head_projection(query, key, value, wc_t, bc, wo_t, bo, mask=None, *,
                          row_tile=512):
    """JAX/Pallas equivalent of MultiHeadProjection.forward.

    query/key/mask are accepted (and ignored) to mirror the PyTorch signature.
    value: (B, S, E). wc_t/wo_t are (in, out)-layout weights; bc/bo are (1, E).
    Returns (output, output) with shape (B, S, E) in value's dtype.
    """
    del query, key, mask  # unused by the reference forward pass
    B, S, E = value.shape
    out_dtype = value.dtype
    # bf16 only when value is natively bf16 (no wrapper-side cast passes over V).
    compute_dtype = jnp.bfloat16 if value.dtype == jnp.bfloat16 else jnp.float32

    # Fold the two affine layers into one (exact up to f32 rounding). Under jit
    # this is a tiny fused (E,E) matmul — no extra HBM passes over V.
    wo32 = wo_t.astype(jnp.float32)
    w_fold = jnp.dot(wc_t.astype(jnp.float32), wo32).astype(compute_dtype)
    b_fold = (jnp.dot(bc.astype(jnp.float32), wo32)
              + bo.astype(jnp.float32)).reshape(1, E)

    M = B * S
    v2d = value.reshape(M, E).astype(compute_dtype)   # no-op cast for f32/bf16 inputs

    v_isize = jnp.dtype(compute_dtype).itemsize
    o_isize = jnp.dtype(out_dtype).itemsize
    rt, nt, vmem_limit = _pick_tiles(M, E, row_tile, v_isize, v_isize, o_isize)
    n_steps = pl.cdiv(E, nt)
    grid = (pl.cdiv(M, rt), n_steps)

    const_kw = {}
    if n_steps == 1 and _SINGLE_BUFFER_OK:
        # Weight/bias are grid-invariant -> single buffer saves E*E bytes of VMEM.
        const_kw = {"pipeline_mode": pl.Buffered(1)}

    cost = pl.CostEstimate(
        flops=2 * M * E * E,
        transcendentals=0,
        bytes_accessed=M * E * (v_isize + o_isize) + E * E * v_isize + E * 4,
    )

    out2d = pl.pallas_call(
        _proj_kernel,
        out_shape=jax.ShapeDtypeStruct((M, E), out_dtype),
        grid_spec=pltpu.PrefetchScalarGridSpec(
            num_scalar_prefetch=0,
            grid=grid,
            in_specs=[
                pl.BlockSpec((rt, E), lambda i, j: (i, 0)),              # V rows (resident across j)
                pl.BlockSpec((E, nt), lambda i, j: (0, j), **const_kw),  # folded weight
                pl.BlockSpec((1, nt), lambda i, j: (0, j), **const_kw),  # folded bias
            ],
            out_specs=pl.BlockSpec((rt, nt), lambda i, j: (i, j)),
        ),
        compiler_params=pltpu.CompilerParams(
            dimension_semantics=("parallel", "arbitrary"),
            vmem_limit_bytes=vmem_limit,
        ),
        cost_estimate=cost,
    )(v2d, w_fold, b_fold)

    out = out2d.reshape(B, S, E)
    return out, out


def init_params(key, embed_dim, num_heads):
    """Deterministic synthetic init mirroring the module's parameter shapes."""
    head_dim = embed_dim // num_heads
    k_heads, k_wo, k_bo = jax.random.split(key, 3)

    # heads[i].weight: (head_dim, embed_dim), xavier_uniform; bias zeros.
    bound_h = (6.0 / (embed_dim + head_dim)) ** 0.5
    head_w = jax.random.uniform(k_heads, (num_heads, head_dim, embed_dim),
                                minval=-bound_h, maxval=bound_h, dtype=jnp.float32)
    wc_t = head_w.reshape(num_heads * head_dim, embed_dim).T     # (E_in, E_out)
    bc = jnp.zeros((1, embed_dim), dtype=jnp.float32)

    # out_linear: nn.Linear default init, uniform(+-1/sqrt(fan_in))
    bound_o = 1.0 / (embed_dim ** 0.5)
    wo_t = jax.random.uniform(k_wo, (embed_dim, embed_dim),
                              minval=-bound_o, maxval=bound_o, dtype=jnp.float32).T
    bo = jax.random.uniform(k_bo, (1, embed_dim),
                            minval=-bound_o, maxval=bound_o, dtype=jnp.float32)
    return wc_t, bc, wo_t, bo


def _reference(value, wc_t, bc, wo_t, bo):
    """Pure-JAX two-stage reference of the module's forward pass."""
    B, S, E = value.shape
    v = value.reshape(-1, E).astype(jnp.float32)
    out = (v @ wc_t + bc) @ wo_t + bo
    return out.reshape(B, S, E)


if __name__ == "__main__":
    embed_dim, num_heads = 32, 4
    B, S = 2, 8

    root = jax.random.PRNGKey(0)
    k_q, k_k, k_v, k_p, k_v2 = jax.random.split(root, 5)
    query = jax.random.normal(k_q, (B, S, embed_dim), dtype=jnp.float32)
    key_t = jax.random.normal(k_k, (B, S, embed_dim), dtype=jnp.float32)
    value = jax.random.normal(k_v, (B, S, embed_dim), dtype=jnp.float32)
    wc_t, bc, wo_t, bo = init_params(k_p, embed_dim, num_heads)

    ref = _reference(value, wc_t, bc, wo_t, bo)

    # f32 path (exact up to f32 rounding of the one-time weight fold)
    out, out2 = multi_head_projection(query, key_t, value, wc_t, bc, wo_t, bo)
    out = jax.block_until_ready(out)
    assert out.shape == (B, S, embed_dim) and out.dtype == value.dtype
    assert jnp.allclose(out, ref, atol=1e-4, rtol=1e-4)
    assert jnp.array_equal(out, out2)

    # native-bf16 path (halves V/out HBM bytes on this memory-bound op)
    out_bf16, _ = multi_head_projection(query, key_t, value.astype(jnp.bfloat16),
                                        wc_t, bc, wo_t, bo)
    out_bf16 = jax.block_until_ready(out_bf16)
    assert out_bf16.dtype == jnp.bfloat16
    assert jnp.allclose(out_bf16.astype(jnp.float32), ref, atol=1e-1, rtol=1e-1)

    # ragged-M path (M=111 not a multiple of the row tile; no padding / slicing)
    Br, Sr = 3, 37
    value_r = jax.random.normal(k_v2, (Br, Sr, embed_dim), dtype=jnp.float32)
    out_r, _ = multi_head_projection(value_r, value_r, value_r, wc_t, bc, wo_t, bo)
    out_r = jax.block_until_ready(out_r)
    ref_r = _reference(value_r, wc_t, bc, wo_t, bo)
    assert jnp.allclose(out_r, ref_r, atol=1e-4, rtol=1e-4)

    print("KERNEL_OK")
</pallas_src>

<mosaic_0001>
module attributes {stable_mosaic.version = 11 : i64} {
  func.func @_proj_kernel(%arg0: i32, %arg1: i32, %arg2: memref<8x32xf32, #tpu.memory_space<vmem>>, %arg3: memref<32x32xf32, #tpu.memory_space<vmem>>, %arg4: memref<1x32xf32, #tpu.memory_space<vmem>>, %arg5: memref<8x32xf32, #tpu.memory_space<vmem>>) attributes {dimension_semantics = [#tpu.dimension_semantics<parallel>, #tpu.dimension_semantics<arbitrary>], iteration_bounds = array<i64: 2, 1>, scalar_prefetch = 0 : i64, scratch_operands = 0 : i64, tpu.core_type = #tpu.core_type<tc>, window_params = [{transform_indices = @transform_0, window_bounds = array<i64: 8, 32>}, {transform_indices = @transform_1, window_bounds = array<i64: 32, 32>}, {transform_indices = @transform_2, window_bounds = array<i64: 1, 32>}, {transform_indices = @transform_3, window_bounds = array<i64: 8, 32>}]} {
    %c0 = arith.constant 0 : index
    %c0_0 = arith.constant 0 : index
    %0 = vector.load %arg2[%c0, %c0_0] : memref<8x32xf32, #tpu.memory_space<vmem>>, vector<8x32xf32>
    %c0_1 = arith.constant 0 : index
    %c0_2 = arith.constant 0 : index
    %1 = vector.load %arg3[%c0_1, %c0_2] : memref<32x32xf32, #tpu.memory_space<vmem>>, vector<32x32xf32>
    %cst = arith.constant dense<0.000000e+00> : vector<8x32xf32>
    %2 = tpu.matmul %0, %1, %cst {dimension_numbers = #tpu.dot_dimension_numbers<[1], [0], [0], [1], [0, 0, 1, 1], [], []>} : vector<8x32xf32>, vector<32x32xf32>, vector<8x32xf32> -> vector<8x32xf32>
    %c0_3 = arith.constant 0 : index
    %c0_4 = arith.constant 0 : index
    %3 = vector.load %arg4[%c0_3, %c0_4] : memref<1x32xf32, #tpu.memory_space<vmem>>, vector<1x32xf32>
    %4 = vector.broadcast %3 : vector<1x32xf32> to vector<8x32xf32>
    %5 = arith.addf %2, %4 : vector<8x32xf32>
    %c0_5 = arith.constant 0 : index
    %c0_6 = arith.constant 0 : index
    %6 = vector.load %arg5[%c0_5, %c0_6] : memref<8x32xf32, #tpu.memory_space<vmem>>, vector<8x32xf32>
    tpu.vector_store %arg5[%c0_5, %c0_6], %5 {strides = array<i32>} : memref<8x32xf32, #tpu.memory_space<vmem>>, vector<8x32xf32>,
    return
  }
  func.func @transform_0(%arg0: i32, %arg1: i32) -> (i32, i32) {
    %c0_i32 = arith.constant 0 : i32
    %c0_i32_0 = arith.constant 0 : i32
    return %arg0, %c0_i32 : i32, i32
  }
  func.func @transform_1(%arg0: i32, %arg1: i32) -> (i32, i32) {
    %c0_i32 = arith.constant 0 : i32
    %c0_i32_0 = arith.constant 0 : i32
    return %c0_i32, %arg1 : i32, i32
  }
  func.func @transform_2(%arg0: i32, %arg1: i32) -> (i32, i32) {
    %c0_i32 = arith.constant 0 : i32
    %c0_i32_0 = arith.constant 0 : i32
    return %c0_i32, %arg1 : i32, i32
  }
  func.func @transform_3(%arg0: i32, %arg1: i32) -> (i32, i32) {
    %c0_i32 = arith.constant 0 : i32
    return %arg0, %arg1 : i32, i32
  }
}

</mosaic_0001>

<llo_original>
// kernel: multi_head_projection.1
$region0: #{multi_head_projection.1}
  #allocation0 [shape = 'u32[]', space=smem, size = 0x4, offset = 0x4, fixed_abs, tag = 'smem constant byte address 0x4 - core index']
  #allocation1 [shape = 'u32[144,128]{1,0:T(1,128)}', space=vmem, size = 0x12000, scoped, tag = 'internal scratch']
  %s0 = inlined_call_operand.vmem [shape: f32[16,32], index: 0, kind: input, shape index: {}]
  %s1 = inlined_call_operand.vmem [shape: f32[32,32], index: 1, kind: input, shape index: {}]
  %s2 = inlined_call_operand.vmem [shape: f32[1,32], index: 2, kind: input, shape index: {}]
  %s3 = inlined_call_operand.vmem [shape: f32[16,32], index: 3, kind: output, shape index: {}]
  %s4 = sld [smem:[#allocation0]]
  $region45: #{multi_head_projection.1} parent=0
    _
  %s6 = ssub.s32 1, %s4
  %s7 = scalar_select 0, %s6, %s4
  loop: start=0, step=1, limit=4
  $region2: #{multi_head_projection.1} parent=0 // loop_pre_header
    _
  $region3: #{multi_head_projection.1} parent=0 // loop_header
    %s9 = sphi 0, %s13
    %p10 = scmp.ge.s32.totalorder %s9, 4
    %s16 = sphi 0, %s28
    %s17 = sphi 0, %s24
    %s18 = sphi 0, %s16
    %s19 = sphi 0, %s17
    %s20 = sphi 0, %s18
    %s21 = sphi 0, %s19
    %s31 = sphi 0, %s33
    %s34 = sphi 0, %s31
    %s35 = sphi 0, %s34
    %s51 = sphi 0, %s35
    %s57 = sphi 0, %s59
    %s60 = sphi 0, %s57
    %s61 = sphi 0, %s60
    %s77 = sphi 0, %s61
    %s83 = sphi 0, %s85
    %s86 = sphi 0, %s83
    %s87 = sphi 0, %s86
    %s103 = sphi 0, %s87
    %s111 = sphi 0, %s113
    %s114 = sphi 0, %s111
    %s115 = sphi 0, %s114
    %s131 = sphi 0, %s115
  $region4: #{multi_head_projection.1} parent=0 // loop_header_branch
    %12 = sbr.rel (%p10) target = $region8
  $region5: #{multi_head_projection.1} parent=0 // loop_body
    %s14 = ssub.s32 %s9, 1
    %s15 = ssub.s32 %s9, 2
    %s22 = sadd.s32 1, %s17
    %p23 = scmp.ge.s32.totalorder %s22, 1
    %s24 = scalar_select %p23, 0, %s22
    %s25 = sadd.s32 1, %s16
    %s26 = scalar_select %p23, %s25, %s16
    %p27 = scmp.ge.s32.totalorder %s26, 2
    %s28 = scalar_select %p27, 0, %s26
    %s29 = ssub.s32 %s16, %s28
    %p30 = scmp.eq.s32.totalorder %s29, 0
    %s32 = sadd.s32 %s31, 1
    %s33 = scalar_select %p30, %s31, %s32
    %p36 = pneg %p30
    %p37 = scmp.eq.s32.totalorder %s9, 1
    %p38 = por %p36, %p37
    %p39 = scmp.ne.s32.totalorder %s31, %s34
    %p40 = scmp.eq.s32.totalorder %s9, 0
    %p41 = por %p39, %p40
    %p42 = scmp.ne.s32.totalorder %s31, %s34
    %p43 = scmp.eq.s32.totalorder %s14, 1
    %p44 = por %p42, %p43
    %p45 = scmp.ne.s32.totalorder %s34, %s35
    %p46 = scmp.eq.s32.totalorder %s14, 0
    %p47 = por %p45, %p46
    %p48 = scmp.ne.s32.totalorder %s34, %s35
    %p49 = scmp.eq.s32.totalorder %s15, 1
    %p50 = por %p48, %p49
    %p52 = scmp.ne.s32.totalorder %s35, %s51
    %p53 = scmp.eq.s32.totalorder %s15, 0
    %p54 = por %p52, %p53
    %s55 = ssub.s32 %s17, %s24
    %p56 = scmp.eq.s32.totalorder %s55, 0
    %s58 = sadd.s32 %s57, 1
    %s59 = scalar_select %p56, %s57, %s58
    %p62 = pneg %p56
    %p63 = scmp.eq.s32.totalorder %s9, 1
    %p64 = por %p62, %p63
    %p65 = scmp.ne.s32.totalorder %s57, %s60
    %p66 = scmp.eq.s32.totalorder %s9, 0
    %p67 = por %p65, %p66
    %p68 = scmp.ne.s32.totalorder %s57, %s60
    %p69 = scmp.eq.s32.totalorder %s14, 1
    %p70 = por %p68, %p69
    %p71 = scmp.ne.s32.totalorder %s60, %s61
    %p72 = scmp.eq.s32.totalorder %s14, 0
    %p73 = por %p71, %p72
    %p74 = scmp.ne.s32.totalorder %s60, %s61
    %p75 = scmp.eq.s32.totalorder %s15, 1
    %p76 = por %p74, %p75
    %p78 = scmp.ne.s32.totalorder %s61, %s77
    %p79 = scmp.eq.s32.totalorder %s15, 0
    %p80 = por %p78, %p79
    %s81 = ssub.s32 %s17, %s24
    %p82 = scmp.eq.s32.totalorder %s81, 0
    %s84 = sadd.s32 %s83, 1
    %s85 = scalar_select %p82, %s83, %s84
    %p88 = pneg %p82
    %p89 = scmp.eq.s32.totalorder %s9, 1
    %p90 = por %p88, %p89
    %p91 = scmp.ne.s32.totalorder %s83, %s86
    %p92 = scmp.eq.s32.totalorder %s9, 0
    %p93 = por %p91, %p92
    %p94 = scmp.ne.s32.totalorder %s83, %s86
    %p95 = scmp.eq.s32.totalorder %s14, 1
    %p96 = por %p94, %p95
    %p97 = scmp.ne.s32.totalorder %s86, %s87
    %p98 = scmp.eq.s32.totalorder %s14, 0
    %p99 = por %p97, %p98
    %p100 = scmp.ne.s32.totalorder %s86, %s87
    %p101 = scmp.eq.s32.totalorder %s15, 1
    %p102 = por %p100, %p101
    %p104 = scmp.ne.s32.totalorder %s87, %s103
    %p105 = scmp.eq.s32.totalorder %s15, 0
    %p106 = por %p104, %p105
    %s107 = ssub.s32 %s16, %s28
    %s108 = ssub.s32 %s17, %s24
    %s109 = sor.u32 %s107, %s108
    %p110 = scmp.eq.s32.totalorder %s109, 0
    %s112 = sadd.s32 %s111, 1
    %s113 = scalar_select %p110, %s111, %s112
    %p116 = pneg %p110
    %p117 = scmp.eq.s32.totalorder %s9, 1
    %p118 = por %p116, %p117
    %p119 = scmp.ne.s32.totalorder %s111, %s114
    %p120 = scmp.eq.s32.totalorder %s9, 0
    %p121 = por %p119, %p120
    %p122 = scmp.ne.s32.totalorder %s111, %s114
    %p123 = scmp.eq.s32.totalorder %s14, 1
    %p124 = por %p122, %p123
    %p125 = scmp.ne.s32.totalorder %s114, %s115
    %p126 = scmp.eq.s32.totalorder %s14, 0
    %p127 = por %p125, %p126
    %p128 = scmp.ne.s32.totalorder %s114, %s115
    %p129 = scmp.eq.s32.totalorder %s15, 1
    %p130 = por %p128, %p129
    %p132 = scmp.ne.s32.totalorder %s115, %s131
    %p133 = scmp.eq.s32.totalorder %s15, 0
    %p134 = por %p132, %p133
    %p135 = scmp.le.s32.totalorder 1, %s9
    %p136 = scmp.lt.s32.totalorder %s9, 3
    %p137 = pnand %p135, %p136
    %p138 = pneg %p137
    // Predicated region
    $region9: #{multi_head_projection.1} parent=5 // pred_check
      _
    $region10: #{multi_head_projection.1} parent=5 // pred_check_branch
      %140 = sbr.rel (%p137) target = $region12
    $region11: #{multi_head_projection.1} parent=5 // pred_region
      %s141 = ssub.s32 %s9, 1
      // Predicated region
      $region13: #{multi_head_projection.1} parent=11 // pred_check
        %p142 = pneg %p73
      $region14: #{multi_head_projection.1} parent=11 // pred_check_branch
        %144 = sbr.rel (%p142) target = $region16
      $region15: #{multi_head_projection.1} parent=11 // pred_region
        %p145 = scmp.lt.s32.totalorder %s19, 0
        %s146 = scalar_select %p145, %s19, 0
        %s147 = smul.addr %s146, 8
        %s148 = scalar_lea.vmem %s1, %s147
      $region16: #{multi_head_projection.1} parent=11 // pred_fallthru
        _
      // Predicated region
      $region17: #{multi_head_projection.1} parent=11 // pred_check
        %p149 = pneg %p99
      $region18: #{multi_head_projection.1} parent=11 // pred_check_branch
        %151 = sbr.rel (%p149) target = $region20
      $region19: #{multi_head_projection.1} parent=11 // pred_region
        %p152 = scmp.lt.s32.totalorder %s19, 0
        %s153 = scalar_select %p152, %s19, 0
        %s154 = scalar_lea.vmem %s2, %s153
      $region20: #{multi_head_projection.1} parent=11 // pred_fallthru
        _
    $region12: #{multi_head_projection.1} parent=5 // pred_fallthru
      _
    %p155 = scmp.lt.s32.totalorder %s9, 2
    // Predicated region
    $region21: #{multi_head_projection.1} parent=5 // pred_check
      %p156 = pneg %p155
    $region22: #{multi_head_projection.1} parent=5 // pred_check_branch
      %158 = sbr.rel (%p156) target = $region24
    $region23: #{multi_head_projection.1} parent=5 // pred_region
      // Predicated region
      $region25: #{multi_head_projection.1} parent=23 // pred_check
        %p159 = pneg %p41
      $region26: #{multi_head_projection.1} parent=23 // pred_check_branch
        %161 = sbr.rel (%p159) target = $region28
      $region27: #{multi_head_projection.1} parent=23 // pred_region
        %p162 = scmp.lt.s32.totalorder %s16, 1
        %s163 = scalar_select %p162, %s16, 1
        %s164 = smul.addr %s163, 8
        %s165 = scalar_lea.vmem %s0, %s164
      $region28: #{multi_head_projection.1} parent=23 // pred_fallthru
        _
    $region24: #{multi_head_projection.1} parent=5 // pred_fallthru
      _
    %p166 = scmp.le.s32.totalorder 1, %s9
    %p167 = scmp.lt.s32.totalorder %s9, 3
    %p168 = pnand %p166, %p167
    %p169 = pneg %p168
    // Predicated region
    $region29: #{multi_head_projection.1} parent=5 // pred_check
      _
    $region30: #{multi_head_projection.1} parent=5 // pred_check_branch
      %171 = sbr.rel (%p168) target = $region32
    $region31: #{multi_head_projection.1} parent=5 // pred_region
      %s172 = ssub.s32 %s9, 1
      %p173 = scmp.lt.s32.totalorder %s18, 1
      %s174 = scalar_select %p173, %s18, 1
      %s175 = smul.addr %s174, 8
      %s176 = scalar_lea.vmem %s0, %s175
      %p177 = pneg %p47
      %p178 = pneg %p44
      %p179 = scmp.lt.s32.totalorder %s19, 0
      %s180 = scalar_select %p179, %s19, 0
      %s181 = smul.addr %s180, 8
      %s182 = scalar_lea.vmem %s1, %s181
      %p183 = pneg %p73
      %p184 = pneg %p70
      %p185 = scmp.lt.s32.totalorder %s19, 0
      %s186 = scalar_select %p185, %s19, 0
      %s187 = scalar_lea.vmem %s2, %s186
      %p188 = pneg %p99
      %p189 = pneg %p96
      %p190 = pneg %p127
      %p191 = pneg %p124
      %p192 = scmp.lt.s32.totalorder %s18, 1
      %s193 = scalar_select %p192, %s18, 1
      %p194 = scmp.lt.s32.totalorder %s19, 0
      %s195 = scalar_select %p194, %s19, 0
      %s196 = sadd.s32 %s195, %s193
      %s197 = smul.addr %s196, 8
      %s198 = scalar_lea.vmem %s3, %s197
      %p199 = scmp.lt.s32.totalorder %s18, 1
      %s200 = scalar_select %p199, %s18, 1
      %s201 = smul.addr %s200, 8
      %s202 = scalar_lea.vmem %s0, %s201
      %p203 = scmp.lt.s32.totalorder %s19, 0
      %s204 = scalar_select %p203, %s19, 0
      %s205 = smul.addr %s204, 8
      %s206 = scalar_lea.vmem %s1, %s205
      %p207 = scmp.lt.s32.totalorder %s19, 0
      %s208 = scalar_select %p207, %s19, 0
      %s209 = scalar_lea.vmem %s2, %s208
      %p210 = scmp.lt.s32.totalorder %s18, 1
      %s211 = scalar_select %p210, %s18, 1
      %p212 = scmp.lt.s32.totalorder %s19, 0
      %s213 = scalar_select %p212, %s19, 0
      %s214 = sadd.s32 %s213, %s211
      %s215 = smul.addr %s214, 8
      %s216 = scalar_lea.vmem %s3, %s215
      %v217 = vld [vmem:[%s202] sm:$0xff]
      %v218 = vld [vmem:[%s206] sm:$0xff]
      %v219 = vld [vmem:[%s206 + $0x8] sm:$0xff]
      %v220 = vld [vmem:[%s206 + $0x10] sm:$0xff]
      %v221 = vld [vmem:[%s206 + $0x18] sm:$0xff]
      %v222 = vld [vmem:[%s209] sm:$0x1]
      %v224 = vlaneseq
      %v225 = vshrl.u32 %v224, 7
      %v226 = vsub.s32 0, %v225
      %v227 = vrot.slane %v222, %v226
      %vm229 = vcmask 261120
      %v231 = vsel %vm229, %v217, 0
      %233 = vmatprep.subr.mxu0 0.0
      %234 = vmatpush1.msra.mxu0 0.0
      %235 = vmatprep.subr.mxu0 0.0
      %236 = vmatpush1.msra.mxu0 0.0
      %237 = vmatprep.subr.mxu0 0.0
      %238 = vmatpush1.msra.mxu0 0.0
      %239 = vmatprep.subr.mxu0 0.0
      %240 = vmatpush1.msra.mxu0 0.0
      %241 = vmatprep.subr.mxu0 0.0
      %242 = vmatpush1.msra.mxu0 0.0
      %243 = vmatprep.subr.mxu0 0.0
      %244 = vmatpush1.msra.mxu0 0.0
      %245 = vmatprep.subr.mxu0 0.0
      %246 = vmatpush1.msra.mxu0 0.0
      %247 = vmatprep.subr.mxu0 0.0
      %248 = vmatpush1.msra.mxu0 0.0
      %249 = vmatprep.subr.mxu0 0.0
      %250 = vmatpush1.msra.mxu0 0.0
      %251 = vmatprep.subr.mxu0 0.0
      %252 = vmatpush1.msra.mxu0 0.0
      %253 = vmatprep.subr.mxu0 0.0
      %254 = vmatpush1.msra.mxu0 0.0
      %255 = vmatprep.subr.mxu0 0.0
      %256 = vmatpush1.msra.mxu0 0.0
      %257 = vmatprep.subr.mxu0 0.0
      %258 = vmatpush1.msra.mxu0 %v221
      %259 = vmatprep.subr.mxu0 0.0
      %260 = vmatpush1.msra.mxu0 %v220
      %261 = vmatprep.subr.mxu0 0.0
      %262 = vmatpush1.msra.mxu0 %v219
      %263 = vmatprep.subr.mxu0 0.0
      %264 = vmatpush1.msra.mxu0 %v218
      %265 = vmatprep.subr.mxu0 0.0
      %266 = vmatpush2.msra.mxu0 0.0
      %267 = vmatprep.subr.mxu0 0.0
      %268 = vmatpush2.msra.mxu0 0.0
      %269 = vmatprep.subr.mxu0 0.0
      %270 = vmatpush2.msra.mxu0 0.0
      %271 = vmatprep.subr.mxu0 0.0
      %272 = vmatpush2.msra.mxu0 0.0
      %273 = vmatprep.subr.mxu0 0.0
      %274 = vmatpush2.msra.mxu0 0.0
      %275 = vmatprep.subr.mxu0 0.0
      %276 = vmatpush2.msra.mxu0 0.0
      %277 = vmatprep.subr.mxu0 0.0
      %278 = vmatpush2.msra.mxu0 0.0
      %279 = vmatprep.subr.mxu0 0.0
      %280 = vmatpush2.msra.mxu0 0.0
      %281 = vmatprep.subr.mxu0 0.0
      %282 = vmatpush2.msra.mxu0 0.0
      %283 = vmatprep.subr.mxu0 0.0
      %284 = vmatpush2.msra.mxu0 0.0
      %285 = vmatprep.subr.mxu0 0.0
      %286 = vmatpush2.msra.mxu0 0.0
      %287 = vmatprep.subr.mxu0 0.0
      %288 = vmatpush2.msra.mxu0 0.0
      %289 = vmatprep.subr.mxu0 0.0
      %290 = vmatpush2.msra.mxu0 0.0
      %291 = vmatprep.subr.mxu0 0.0
      %292 = vmatpush2.msra.mxu0 0.0
      %293 = vmatprep.subr.mxu0 0.0
      %294 = vmatpush2.msra.mxu0 0.0
      %295 = vmatprep.subr.mxu0 0.0
      %296 = vmatpush2.msra.mxu0 0.0
      %297 = vmatprep.mubr.f32.mxu0 0.0
      %298 = vmatmul.mubr.f32.gmra.mxu0 %v231
      %v299 = vpop.f32.mrf.mxu0
      %v300 = vadd.f32 %v227, %v299
      %v301 = vpop.f32.mrf.mxu0
      %302 = vdwg.mxu0
      %303 = vst.msk [vmem:[%s216] sm:$0xff] %vm229, %v300
      %p304 = scmp.lt.s32.totalorder %s18, 1
      %s305 = scalar_select %p304, %s18, 1
      %p306 = scmp.lt.s32.totalorder %s19, 0
      %s307 = scalar_select %p306, %s19, 0
      %s308 = sadd.s32 %s307, %s305
      %s309 = smul.addr %s308, 8
      %s310 = scalar_lea.vmem %s3, %s309
      // Predicated region
      $region33: #{multi_head_projection.1} parent=31 // pred_check
        %p311 = pneg %p124
      $region34: #{multi_head_projection.1} parent=31 // pred_check_branch
        %313 = sbr.rel (%p311) target = $region36
      $region35: #{multi_head_projection.1} parent=31 // pred_region
        _
      $region36: #{multi_head_projection.1} parent=31 // pred_fallthru
        _
    $region32: #{multi_head_projection.1} parent=5 // pred_fallthru
      _
    %p314 = scmp.le.s32.totalorder 2, %s9
    // Predicated region
    $region37: #{multi_head_projection.1} parent=5 // pred_check
      %p315 = pneg %p314
    $region38: #{multi_head_projection.1} parent=5 // pred_check_branch
      %317 = sbr.rel (%p315) target = $region40
    $region39: #{multi_head_projection.1} parent=5 // pred_region
      %s318 = ssub.s32 %s9, 2
      // Predicated region
      $region41: #{multi_head_projection.1} parent=39 // pred_check
        %p319 = pneg %p130
      $region42: #{multi_head_projection.1} parent=39 // pred_check_branch
        %321 = sbr.rel (%p319) target = $region44
      $region43: #{multi_head_projection.1} parent=39 // pred_region
        %p322 = scmp.lt.s32.totalorder %s20, 1
        %s323 = scalar_select %p322, %s20, 1
        %p324 = scmp.lt.s32.totalorder %s21, 0
        %s325 = scalar_select %p324, %s21, 0
        %s326 = sadd.s32 %s325, %s323
        %s327 = smul.addr %s326, 8
        %s328 = scalar_lea.vmem %s3, %s327
      $region44: #{multi_head_projection.1} parent=39 // pred_fallthru
        _
    $region40: #{multi_head_projection.1} parent=5 // pred_fallthru
      _
  $region6: #{multi_head_projection.1} parent=0 // loop_footer
    %s13 = sadd.s32 1, %s9
  $region7: #{multi_head_projection.1} parent=0 // loop_footer_branch
    %8 = sbr.rel target = $region3
  $region8: #{multi_head_projection.1} parent=0 // loop_exit
    _

</llo_original>
